<compile_context>
chip_gen: v7x
topology: tpu7x:2x2x1
jax: 0.10.0
libtpu: 0.0.40
codegen_flags: <defaults>
</compile_context>

<pallas_src>
import math

import jax
import jax.numpy as jnp
from jax import lax
from jax.experimental import pallas as pl
from jax.experimental.pallas import tpu as pltpu

DMODEL = 256
WORD_LEN = 8
DROPOUT_PERC = 0.2  # TODO(synk): dropout is identity here (eval-mode); PyTorch train-mode RNG is not reproducible.


def attention_kernel(x_ref, wq_ref, bq_ref, wk_ref, bk_ref, wv_ref, bv_ref, o_ref):
    bb, T, D = x_ref.shape
    dh = wq_ref.shape[1]
    scale = 1.0 / (dh ** 0.5)

    # ---- QKV projections: bf16 operands on the MXU, f32 accumulation. ----
    # Reshape on the f32 ref layout (T=8 == sublane tile -> clean), then cast.
    x2 = x_ref[...].reshape(bb * T, D).astype(jnp.bfloat16)
    q = jnp.dot(x2, wq_ref[...], preferred_element_type=jnp.float32) + bq_ref[...]
    k = jnp.dot(x2, wk_ref[...], preferred_element_type=jnp.float32) + bk_ref[...]
    v = jnp.dot(x2, wv_ref[...], preferred_element_type=jnp.float32) + bv_ref[...]

    qh = q.reshape(bb, T, dh)
    kh = k.reshape(bb, T, dh)
    vh = v.reshape(bb, T, dh)

    # ---- Scores, causal mask (== tril buffer), softmax — all f32. ----
    s = jnp.einsum("bqd,bkd->bqk", qh, kh,
                   preferred_element_type=jnp.float32) * scale
    row = lax.broadcasted_iota(jnp.int32, (T, T), 0)
    col = lax.broadcasted_iota(jnp.int32, (T, T), 1)
    s = jnp.where((col <= row)[None, :, :], s, -jnp.inf)

    m = jnp.max(s, axis=-1, keepdims=True)
    e = jnp.exp(s - m)
    denom = jnp.sum(e, axis=-1, keepdims=True)
    wei = e * pl.reciprocal(denom, approx=True)

    # TODO(synk): self.dropout(wei) skipped (identity in eval mode).

    o = jnp.einsum("bqk,bkd->bqd", wei, vh, preferred_element_type=jnp.float32)
    o_ref[...] = o.astype(o_ref.dtype)


def attention(x, wq, bq, wk, bk, wv, bv, *, batch_block=64):
    """x: (B, T=WORD_LEN, DMODEL) f32; weights (DMODEL, dhead); biases (dhead,)."""
    B, T, D = x.shape
    assert D == DMODEL and T == WORD_LEN
    dh = wq.shape[1]

    # Batch tile: big enough to occupy the MXU (bb*T rows per projection pass),
    # but capped so the grid keeps >=4 steps on larger batches (v7x megacore).
    bb = max(1, min(batch_block, B, max(1, B // 4)))
    nblk = pl.cdiv(B, bb)
    Bp = nblk * bb

    xp = x
    if Bp != B:
        xp = jnp.pad(x, ((0, Bp - B), (0, 0), (0, 0)))

    # Weights in bf16 (halves resident VMEM + HBM bytes); biases stay f32.
    wq_b, wk_b, wv_b = (w.astype(jnp.bfloat16) for w in (wq, wk, wv))
    bq2 = bq.reshape(1, dh).astype(jnp.float32)
    bk2 = bk.reshape(1, dh).astype(jnp.float32)
    bv2 = bv.reshape(1, dh).astype(jnp.float32)

    flops = 3 * 2 * Bp * T * D * dh + 2 * 2 * Bp * T * T * dh
    bytes_accessed = (Bp * T * D * 4            # x
                      + 3 * (D * dh * 2 + dh * 4)  # weights + biases
                      + Bp * T * dh * 4)        # out
    cost = pl.CostEstimate(flops=flops, transcendentals=Bp * T * T,
                           bytes_accessed=bytes_accessed)

    out = pl.pallas_call(
        attention_kernel,
        out_shape=jax.ShapeDtypeStruct((Bp, T, dh), jnp.float32),
        grid_spec=pltpu.PrefetchScalarGridSpec(
            num_scalar_prefetch=0,
            grid=(nblk,),
            in_specs=[
                pl.BlockSpec((bb, T, D), lambda i: (i, 0, 0)),   # x tile
                pl.BlockSpec((D, dh), lambda i: (0, 0)),          # Wq (resident)
                pl.BlockSpec((1, dh), lambda i: (0, 0)),          # bq
                pl.BlockSpec((D, dh), lambda i: (0, 0)),          # Wk (resident)
                pl.BlockSpec((1, dh), lambda i: (0, 0)),          # bk
                pl.BlockSpec((D, dh), lambda i: (0, 0)),          # Wv (resident)
                pl.BlockSpec((1, dh), lambda i: (0, 0)),          # bv
            ],
            out_specs=pl.BlockSpec((bb, T, dh), lambda i: (i, 0, 0)),
        ),
        compiler_params=pltpu.CompilerParams(
            dimension_semantics=("parallel",),
        ),
        cost_estimate=cost,
    )(xp, wq_b, bq2, wk_b, bk2, wv_b, bv2)

    return out[:B]


def init_params(key, dhead):
    """nn.Linear-style init: U(-1/sqrt(fan_in), 1/sqrt(fan_in)); weights stored (in, out)."""
    ks = jax.random.split(key, 6)
    bound = 1.0 / math.sqrt(DMODEL)
    wq = jax.random.uniform(ks[0], (DMODEL, dhead), jnp.float32, -bound, bound)
    bq = jax.random.uniform(ks[1], (dhead,), jnp.float32, -bound, bound)
    wk = jax.random.uniform(ks[2], (DMODEL, dhead), jnp.float32, -bound, bound)
    bk = jax.random.uniform(ks[3], (dhead,), jnp.float32, -bound, bound)
    wv = jax.random.uniform(ks[4], (DMODEL, dhead), jnp.float32, -bound, bound)
    bv = jax.random.uniform(ks[5], (dhead,), jnp.float32, -bound, bound)
    return wq, bq, wk, bk, wv, bv


def attention_ref(x, wq, bq, wk, bk, wv, bv):
    q = x @ wq + bq
    k = x @ wk + bk
    v = x @ wv + bv
    dh = q.shape[-1]
    T = x.shape[1]
    s = jnp.einsum("bqd,bkd->bqk", q, k) / (dh ** 0.5)
    mask = jnp.tril(jnp.ones((T, T), dtype=bool))
    s = jnp.where(mask, s, -jnp.inf)
    wei = jax.nn.softmax(s, axis=-1)
    return jnp.einsum("bqk,bkd->bqd", wei, v)


if __name__ == "__main__":
    key = jax.random.PRNGKey(0)
    kx, kp = jax.random.split(key)

    B, T, dhead = 2, WORD_LEN, 32
    x = jax.random.normal(kx, (B, T, DMODEL), jnp.float32)
    params = init_params(kp, dhead)

    out = attention(x, *params)
    out = jax.block_until_ready(out)

    ref = attention_ref(x, *params)
    assert out.shape == (B, T, dhead)
    # bf16 MXU operands in the projections -> compare against f32 reference
    # with a correspondingly looser tolerance.
    assert jnp.allclose(out, ref, atol=2e-2, rtol=2e-2), "mismatch vs reference"

    print("KERNEL_OK")
</pallas_src>

<mosaic_0001>
module attributes {stable_mosaic.version = 11 : i64} {
  func.func @attention_kernel(%arg0: i32, %arg1: memref<1x8x256xf32, #tpu.memory_space<vmem>>, %arg2: memref<256x32xbf16, #tpu.memory_space<vmem>>, %arg3: memref<1x32xf32, #tpu.memory_space<vmem>>, %arg4: memref<256x32xbf16, #tpu.memory_space<vmem>>, %arg5: memref<1x32xf32, #tpu.memory_space<vmem>>, %arg6: memref<256x32xbf16, #tpu.memory_space<vmem>>, %arg7: memref<1x32xf32, #tpu.memory_space<vmem>>, %arg8: memref<1x8x32xf32, #tpu.memory_space<vmem>>) attributes {dimension_semantics = [#tpu.dimension_semantics<parallel>], iteration_bounds = array<i64: 2>, scalar_prefetch = 0 : i64, scratch_operands = 0 : i64, tpu.core_type = #tpu.core_type<tc>, window_params = [{transform_indices = @transform_0, window_bounds = array<i64: 1, 8, 256>}, {pipeline_mode = #tpu.pipeline_mode<synchronous>, transform_indices = @transform_1, window_bounds = array<i64: 256, 32>}, {pipeline_mode = #tpu.pipeline_mode<synchronous>, transform_indices = @transform_2, window_bounds = array<i64: 1, 32>}, {pipeline_mode = #tpu.pipeline_mode<synchronous>, transform_indices = @transform_3, window_bounds = array<i64: 256, 32>}, {pipeline_mode = #tpu.pipeline_mode<synchronous>, transform_indices = @transform_4, window_bounds = array<i64: 1, 32>}, {pipeline_mode = #tpu.pipeline_mode<synchronous>, transform_indices = @transform_5, window_bounds = array<i64: 256, 32>}, {pipeline_mode = #tpu.pipeline_mode<synchronous>, transform_indices = @transform_6, window_bounds = array<i64: 1, 32>}, {transform_indices = @transform_7, window_bounds = array<i64: 1, 8, 32>}]} {
    %c0 = arith.constant 0 : index
    %c0_0 = arith.constant 0 : index
    %c0_1 = arith.constant 0 : index
    %0 = vector.load %arg1[%c0, %c0_0, %c0_1] : memref<1x8x256xf32, #tpu.memory_space<vmem>>, vector<1x8x256xf32>
    %1 = vector.shape_cast %0 : vector<1x8x256xf32> to vector<8x256xf32>
    %2 = arith.truncf %1 : vector<8x256xf32> to vector<8x256xbf16>
    %c0_2 = arith.constant 0 : index
    %c0_3 = arith.constant 0 : index
    %3 = vector.load %arg2[%c0_2, %c0_3] : memref<256x32xbf16, #tpu.memory_space<vmem>>, vector<256x32xbf16>
    %cst = arith.constant dense<0.000000e+00> : vector<8x32xf32>
    %4 = tpu.matmul %2, %3, %cst {dimension_numbers = #tpu.dot_dimension_numbers<[1], [0], [0], [1], [0, 0, 1, 1], [], []>} : vector<8x256xbf16>, vector<256x32xbf16>, vector<8x32xf32> -> vector<8x32xf32>
    %c0_4 = arith.constant 0 : index
    %c0_5 = arith.constant 0 : index
    %5 = vector.load %arg3[%c0_4, %c0_5] : memref<1x32xf32, #tpu.memory_space<vmem>>, vector<1x32xf32>
    %6 = vector.broadcast %5 : vector<1x32xf32> to vector<8x32xf32>
    %7 = arith.addf %4, %6 : vector<8x32xf32>
    %c0_6 = arith.constant 0 : index
    %c0_7 = arith.constant 0 : index
    %8 = vector.load %arg4[%c0_6, %c0_7] : memref<256x32xbf16, #tpu.memory_space<vmem>>, vector<256x32xbf16>
    %cst_8 = arith.constant dense<0.000000e+00> : vector<8x32xf32>
    %9 = tpu.matmul %2, %8, %cst_8 {dimension_numbers = #tpu.dot_dimension_numbers<[1], [0], [0], [1], [0, 0, 1, 1], [], []>} : vector<8x256xbf16>, vector<256x32xbf16>, vector<8x32xf32> -> vector<8x32xf32>
    %c0_9 = arith.constant 0 : index
    %c0_10 = arith.constant 0 : index
    %10 = vector.load %arg5[%c0_9, %c0_10] : memref<1x32xf32, #tpu.memory_space<vmem>>, vector<1x32xf32>
    %11 = vector.broadcast %10 : vector<1x32xf32> to vector<8x32xf32>
    %12 = arith.addf %9, %11 : vector<8x32xf32>
    %c0_11 = arith.constant 0 : index
    %c0_12 = arith.constant 0 : index
    %13 = vector.load %arg6[%c0_11, %c0_12] : memref<256x32xbf16, #tpu.memory_space<vmem>>, vector<256x32xbf16>
    %cst_13 = arith.constant dense<0.000000e+00> : vector<8x32xf32>
    %14 = tpu.matmul %2, %13, %cst_13 {dimension_numbers = #tpu.dot_dimension_numbers<[1], [0], [0], [1], [0, 0, 1, 1], [], []>} : vector<8x256xbf16>, vector<256x32xbf16>, vector<8x32xf32> -> vector<8x32xf32>
    %c0_14 = arith.constant 0 : index
    %c0_15 = arith.constant 0 : index
    %15 = vector.load %arg7[%c0_14, %c0_15] : memref<1x32xf32, #tpu.memory_space<vmem>>, vector<1x32xf32>
    %16 = vector.broadcast %15 : vector<1x32xf32> to vector<8x32xf32>
    %17 = arith.addf %14, %16 : vector<8x32xf32>
    %18 = vector.shape_cast %7 : vector<8x32xf32> to vector<1x8x32xf32>
    %19 = vector.shape_cast %12 : vector<8x32xf32> to vector<1x8x32xf32>
    %20 = vector.shape_cast %17 : vector<8x32xf32> to vector<1x8x32xf32>
    "tpu.trace_start"() <{level = 10 : i32, message = "bqd,bkd->bqk"}> : () -> ()
    %cst_16 = arith.constant dense<0.000000e+00> : vector<1x8x8xf32>
    %21 = tpu.matmul %18, %19, %cst_16 {dimension_numbers = #tpu.dot_dimension_numbers<[2], [2], [1], [1], [0, 0, 0, 1, 1, 1], [0], [0]>} : vector<1x8x32xf32>, vector<1x8x32xf32>, vector<1x8x8xf32> -> vector<1x8x8xf32>
    "tpu.trace_stop"() : () -> ()
    %cst_17 = arith.constant 0.176776692 : f32
    %22 = vector.broadcast %cst_17 : f32 to vector<1x8x8xf32>
    %23 = arith.mulf %21, %22 : vector<1x8x8xf32>
    %24 = tpu.iota {dimensions = array<i32: 0>} : vector<8x8xi32>
    %25 = tpu.iota {dimensions = array<i32: 1>} : vector<8x8xi32>
    %26 = arith.cmpi sle, %25, %24 : vector<8x8xi32>
    %27 = vector.shape_cast %26 : vector<8x8xi1> to vector<1x8x8xi1>
    %cst_18 = arith.constant 0xFF800000 : f32
    %28 = vector.broadcast %cst_18 : f32 to vector<1x8x8xf32>
    %29 = arith.select %27, %23, %28 : vector<1x8x8xi1>, vector<1x8x8xf32>
    %cst_19 = arith.constant dense<0xFF800000> : vector<1x8xf32>
    %30 = vector.multi_reduction <maximumf>, %29, %cst_19 [2] : vector<1x8x8xf32> to vector<1x8xf32>
    %31 = vector.shape_cast %30 : vector<1x8xf32> to vector<1x8x1xf32>
    %32 = vector.broadcast %31 : vector<1x8x1xf32> to vector<1x8x8xf32>
    %33 = arith.subf %29, %32 : vector<1x8x8xf32>
    %34 = math.exp %33 : vector<1x8x8xf32>
    %cst_20 = arith.constant dense<0.000000e+00> : vector<1x8xf32>
    %35 = vector.multi_reduction <add>, %34, %cst_20 [2] : vector<1x8x8xf32> to vector<1x8xf32>
    %36 = vector.shape_cast %35 : vector<1x8xf32> to vector<1x8x1xf32>
    %37 = tpu.reciprocal %36 {approx = true} : vector<1x8x1xf32> -> vector<1x8x1xf32>
    %38 = vector.broadcast %37 : vector<1x8x1xf32> to vector<1x8x8xf32>
    %39 = arith.mulf %34, %38 : vector<1x8x8xf32>
    "tpu.trace_start"() <{level = 10 : i32, message = "bqk,bkd->bqd"}> : () -> ()
    %cst_21 = arith.constant dense<0.000000e+00> : vector<1x8x32xf32>
    %40 = tpu.matmul %39, %20, %cst_21 {dimension_numbers = #tpu.dot_dimension_numbers<[2], [1], [1], [2], [0, 0, 0, 1, 1, 2], [0], [0]>} : vector<1x8x8xf32>, vector<1x8x32xf32>, vector<1x8x32xf32> -> vector<1x8x32xf32>
    "tpu.trace_stop"() : () -> ()
    %c0_22 = arith.constant 0 : index
    %c0_23 = arith.constant 0 : index
    %c0_24 = arith.constant 0 : index
    %41 = vector.load %arg8[%c0_22, %c0_23, %c0_24] : memref<1x8x32xf32, #tpu.memory_space<vmem>>, vector<1x8x32xf32>
    tpu.vector_store %arg8[%c0_22, %c0_23, %c0_24], %40 {strides = array<i32>} : memref<1x8x32xf32, #tpu.memory_space<vmem>>, vector<1x8x32xf32>,
    return
  }
  func.func @transform_0(%arg0: i32) -> (i32, i32, i32) {
    %c0_i32 = arith.constant 0 : i32
    %c0_i32_0 = arith.constant 0 : i32
    %c0_i32_1 = arith.constant 0 : i32
    return %arg0, %c0_i32, %c0_i32_0 : i32, i32, i32
  }
  func.func @transform_1(%arg0: i32) -> (i32, i32) {
    %c0_i32 = arith.constant 0 : i32
    %c0_i32_0 = arith.constant 0 : i32
    %c0_i32_1 = arith.constant 0 : i32
    return %c0_i32, %c0_i32_0 : i32, i32
  }
  func.func @transform_2(%arg0: i32) -> (i32, i32) {
    %c0_i32 = arith.constant 0 : i32
    %c0_i32_0 = arith.constant 0 : i32
    %c0_i32_1 = arith.constant 0 : i32
    return %c0_i32, %c0_i32_0 : i32, i32
  }
  func.func @transform_3(%arg0: i32) -> (i32, i32) {
    %c0_i32 = arith.constant 0 : i32
    %c0_i32_0 = arith.constant 0 : i32
    %c0_i32_1 = arith.constant 0 : i32
    return %c0_i32, %c0_i32_0 : i32, i32
  }
  func.func @transform_4(%arg0: i32) -> (i32, i32) {
    %c0_i32 = arith.constant 0 : i32
    %c0_i32_0 = arith.constant 0 : i32
    %c0_i32_1 = arith.constant 0 : i32
    return %c0_i32, %c0_i32_0 : i32, i32
  }
  func.func @transform_5(%arg0: i32) -> (i32, i32) {
    %c0_i32 = arith.constant 0 : i32
    %c0_i32_0 = arith.constant 0 : i32
    %c0_i32_1 = arith.constant 0 : i32
    return %c0_i32, %c0_i32_0 : i32, i32
  }
  func.func @transform_6(%arg0: i32) -> (i32, i32) {
    %c0_i32 = arith.constant 0 : i32
    %c0_i32_0 = arith.constant 0 : i32
    %c0_i32_1 = arith.constant 0 : i32
    return %c0_i32, %c0_i32_0 : i32, i32
  }
  func.func @transform_7(%arg0: i32) -> (i32, i32, i32) {
    %c0_i32 = arith.constant 0 : i32
    %c0_i32_0 = arith.constant 0 : i32
    %c0_i32_1 = arith.constant 0 : i32
    return %arg0, %c0_i32, %c0_i32_0 : i32, i32, i32
  }
}

</mosaic_0001>

<llo_original>
// kernel: tpu_custom_call.1
$region0: #{tpu_custom_call.1}
  #allocation0 [shape = 'u32[]', space=smem, size = 0x4, offset = 0x4, fixed_abs, tag = 'smem constant byte address 0x4 - core index']
  #allocation1 [shape = 'u32[144,128]{1,0:T(1,128)}', space=vmem, size = 0x12000, scoped, tag = 'internal scratch']
  %s0 = inlined_call_operand.vmem [shape: f32[2,8,256], index: 0, kind: input, shape index: {}]
  %s1 = inlined_call_operand.vmem [shape: bf16[256,32], index: 1, kind: input, shape index: {}]
  %s2 = inlined_call_operand.vmem [shape: f32[1,32], index: 2, kind: input, shape index: {}]
  %s3 = inlined_call_operand.vmem [shape: bf16[256,32], index: 3, kind: input, shape index: {}]
  %s4 = inlined_call_operand.vmem [shape: f32[1,32], index: 4, kind: input, shape index: {}]
  %s5 = inlined_call_operand.vmem [shape: bf16[256,32], index: 5, kind: input, shape index: {}]
  %s6 = inlined_call_operand.vmem [shape: f32[1,32], index: 6, kind: input, shape index: {}]
  %s7 = inlined_call_operand.hbm [shape: f32[2,8,32], index: 7, kind: output, shape index: {}]
  %s8 = sld [smem:[#allocation0]]
  $region61: #{tpu_custom_call.1} parent=0
    _
  %s10 = ssub.s32 1, %s8
  %s11 = scalar_select 0, %s10, %s8
  $region1: #{tpu_custom_call.1} parent=0
    #allocation2 [shape = 'u8[8192]{0}', space=vmem, size = 0x2000, scoped, tag = 'output window, operand 0']
    #allocation3 [shape = 's32[2]{0}', space=sflag, size = 0x8, scoped, tag = 'scoped memory for tpu_custom_call.1']
    %12 = vsyncpa [#allocation3], 0
    %s13 = scalar_lea.sflag [#allocation3], 1
    %14 = vsyncpa %s13, 0
    loop: start=0, step=1, limit=4
    $region2: #{tpu_custom_call.1} parent=1 // loop_pre_header
      _
    $region3: #{tpu_custom_call.1} parent=1 // loop_header
      %s16 = sphi 0, %s20
      %p17 = scmp.ge.s32.totalorder %s16, 4
      %s26 = sphi 0, %s28
      %s29 = sphi 0, %s26
      %s30 = sphi 0, %s29
      %s46 = sphi 0, %s30
      %s50 = sphi 0, %s50
      %s52 = sphi 0, %s50
      %s53 = sphi 0, %s52
      %s67 = sphi 0, %s53
      %s71 = sphi 0, %s71
      %s73 = sphi 0, %s71
      %s74 = sphi 0, %s73
      %s88 = sphi 0, %s74
      %s92 = sphi 0, %s92
      %s94 = sphi 0, %s92
      %s95 = sphi 0, %s94
      %s109 = sphi 0, %s95
      %s113 = sphi 0, %s113
      %s115 = sphi 0, %s113
      %s116 = sphi 0, %s115
      %s130 = sphi 0, %s116
      %s134 = sphi 0, %s134
      %s136 = sphi 0, %s134
      %s137 = sphi 0, %s136
      %s151 = sphi 0, %s137
      %s155 = sphi 0, %s155
      %s157 = sphi 0, %s155
      %s158 = sphi 0, %s157
      %s172 = sphi 0, %s158
      %s178 = sphi 0, %s180
      %s181 = sphi 0, %s178
      %s182 = sphi 0, %s181
      %s198 = sphi 0, %s182
    $region4: #{tpu_custom_call.1} parent=1 // loop_header_branch
      %19 = sbr.rel (%p17) target = $region8
    $region5: #{tpu_custom_call.1} parent=1 // loop_body
      %s21 = ssub.s32 %s16, 1
      %s22 = ssub.s32 %s16, 2
      %s23 = sadd.s32 %s16, 1
      %s24 = ssub.s32 %s16, %s23
      %p25 = scmp.eq.s32.totalorder %s24, 0
      %s27 = sadd.s32 %s26, 1
      %s28 = scalar_select %p25, %s26, %s27
      %p31 = pneg %p25
      %p32 = scmp.eq.s32.totalorder %s16, 1
      %p33 = por %p31, %p32
      %p34 = scmp.ne.s32.totalorder %s26, %s29
      %p35 = scmp.eq.s32.totalorder %s16, 0
      %p36 = por %p34, %p35
      %p37 = scmp.ne.s32.totalorder %s26, %s29
      %p38 = scmp.eq.s32.totalorder %s21, 1
      %p39 = por %p37, %p38
      %p40 = scmp.ne.s32.totalorder %s29, %s30
      %p41 = scmp.eq.s32.totalorder %s21, 0
      %p42 = por %p40, %p41
      %p43 = scmp.ne.s32.totalorder %s29, %s30
      %p44 = scmp.eq.s32.totalorder %s22, 1
      %p45 = por %p43, %p44
      %p47 = scmp.ne.s32.totalorder %s30, %s46
      %p48 = scmp.eq.s32.totalorder %s22, 0
      %p49 = por %p47, %p48
      %s51 = sadd.s32 %s50, 1
      %p54 = scmp.eq.s32.totalorder %s16, 1
      %p55 = scmp.ne.s32.totalorder %s50, %s52
      %p56 = scmp.eq.s32.totalorder %s16, 0
      %p57 = por %p55, %p56
      %p58 = scmp.ne.s32.totalorder %s50, %s52
      %p59 = scmp.eq.s32.totalorder %s21, 1
      %p60 = por %p58, %p59
      %p61 = scmp.ne.s32.totalorder %s52, %s53
      %p62 = scmp.eq.s32.totalorder %s21, 0
      %p63 = por %p61, %p62
      %p64 = scmp.ne.s32.totalorder %s52, %s53
      %p65 = scmp.eq.s32.totalorder %s22, 1
      %p66 = por %p64, %p65
      %p68 = scmp.ne.s32.totalorder %s53, %s67
      %p69 = scmp.eq.s32.totalorder %s22, 0
      %p70 = por %p68, %p69
      %s72 = sadd.s32 %s71, 1
      %p75 = scmp.eq.s32.totalorder %s16, 1
      %p76 = scmp.ne.s32.totalorder %s71, %s73
      %p77 = scmp.eq.s32.totalorder %s16, 0
      %p78 = por %p76, %p77
      %p79 = scmp.ne.s32.totalorder %s71, %s73
      %p80 = scmp.eq.s32.totalorder %s21, 1
      %p81 = por %p79, %p80
      %p82 = scmp.ne.s32.totalorder %s73, %s74
      %p83 = scmp.eq.s32.totalorder %s21, 0
      %p84 = por %p82, %p83
      %p85 = scmp.ne.s32.totalorder %s73, %s74
      %p86 = scmp.eq.s32.totalorder %s22, 1
      %p87 = por %p85, %p86
      %p89 = scmp.ne.s32.totalorder %s74, %s88
      %p90 = scmp.eq.s32.totalorder %s22, 0
      %p91 = por %p89, %p90
      %s93 = sadd.s32 %s92, 1
      %p96 = scmp.eq.s32.totalorder %s16, 1
      %p97 = scmp.ne.s32.totalorder %s92, %s94
      %p98 = scmp.eq.s32.totalorder %s16, 0
      %p99 = por %p97, %p98
      %p100 = scmp.ne.s32.totalorder %s92, %s94
      %p101 = scmp.eq.s32.totalorder %s21, 1
      %p102 = por %p100, %p101
      %p103 = scmp.ne.s32.totalorder %s94, %s95
      %p104 = scmp.eq.s32.totalorder %s21, 0
      %p105 = por %p103, %p104
      %p106 = scmp.ne.s32.totalorder %s94, %s95
      %p107 = scmp.eq.s32.totalorder %s22, 1
      %p108 = por %p106, %p107
      %p110 = scmp.ne.s32.totalorder %s95, %s109
      %p111 = scmp.eq.s32.totalorder %s22, 0
      %p112 = por %p110, %p111
      %s114 = sadd.s32 %s113, 1
      %p117 = scmp.eq.s32.totalorder %s16, 1
      %p118 = scmp.ne.s32.totalorder %s113, %s115
      %p119 = scmp.eq.s32.totalorder %s16, 0
      %p120 = por %p118, %p119
      %p121 = scmp.ne.s32.totalorder %s113, %s115
      %p122 = scmp.eq.s32.totalorder %s21, 1
      %p123 = por %p121, %p122
      %p124 = scmp.ne.s32.totalorder %s115, %s116
      %p125 = scmp.eq.s32.totalorder %s21, 0
      %p126 = por %p124, %p125
      %p127 = scmp.ne.s32.totalorder %s115, %s116
      %p128 = scmp.eq.s32.totalorder %s22, 1
      %p129 = por %p127, %p128
      %p131 = scmp.ne.s32.totalorder %s116, %s130
      %p132 = scmp.eq.s32.totalorder %s22, 0
      %p133 = por %p131, %p132
      %s135 = sadd.s32 %s134, 1
      %p138 = scmp.eq.s32.totalorder %s16, 1
      %p139 = scmp.ne.s32.totalorder %s134, %s136
      %p140 = scmp.eq.s32.totalorder %s16, 0
      %p141 = por %p139, %p140
      %p142 = scmp.ne.s32.totalorder %s134, %s136
      %p143 = scmp.eq.s32.totalorder %s21, 1
      %p144 = por %p142, %p143
      %p145 = scmp.ne.s32.totalorder %s136, %s137
      %p146 = scmp.eq.s32.totalorder %s21, 0
      %p147 = por %p145, %p146
      %p148 = scmp.ne.s32.totalorder %s136, %s137
      %p149 = scmp.eq.s32.totalorder %s22, 1
      %p150 = por %p148, %p149
      %p152 = scmp.ne.s32.totalorder %s137, %s151
      %p153 = scmp.eq.s32.totalorder %s22, 0
      %p154 = por %p152, %p153
      %s156 = sadd.s32 %s155, 1
      %p159 = scmp.eq.s32.totalorder %s16, 1
      %p160 = scmp.ne.s32.totalorder %s155, %s157
      %p161 = scmp.eq.s32.totalorder %s16, 0
      %p162 = por %p160, %p161
      %p163 = scmp.ne.s32.totalorder %s155, %s157
      %p164 = scmp.eq.s32.totalorder %s21, 1
      %p165 = por %p163, %p164
      %p166 = scmp.ne.s32.totalorder %s157, %s158
      %p167 = scmp.eq.s32.totalorder %s21, 0
      %p168 = por %p166, %p167
      %p169 = scmp.ne.s32.totalorder %s157, %s158
      %p170 = scmp.eq.s32.totalorder %s22, 1
      %p171 = por %p169, %p170
      %p173 = scmp.ne.s32.totalorder %s158, %s172
      %p174 = scmp.eq.s32.totalorder %s22, 0
      %p175 = por %p173, %p174
      %s176 = ssub.s32 %s16, %s23
      %p177 = scmp.eq.s32.totalorder %s176, 0
      %s179 = sadd.s32 %s178, 1
      %s180 = scalar_select %p177, %s178, %s179
      %p183 = pneg %p177
      %p184 = scmp.eq.s32.totalorder %s16, 1
      %p185 = por %p183, %p184
      %p186 = scmp.ne.s32.totalorder %s178, %s181
      %p187 = scmp.eq.s32.totalorder %s16, 0
      %p188 = por %p186, %p187
      %p189 = scmp.ne.s32.totalorder %s178, %s181
      %p190 = scmp.eq.s32.totalorder %s21, 1
      %p191 = por %p189, %p190
      %p192 = scmp.ne.s32.totalorder %s181, %s182
      %p193 = scmp.eq.s32.totalorder %s21, 0
      %p194 = por %p192, %p193
      %p195 = scmp.ne.s32.totalorder %s181, %s182
      %p196 = scmp.eq.s32.totalorder %s22, 1
      %p197 = por %p195, %p196
      %p199 = scmp.ne.s32.totalorder %s182, %s198
      %p200 = scmp.eq.s32.totalorder %s22, 0
      %p201 = por %p199, %p200
      %p202 = scmp.le.s32.totalorder 1, %s16
      %p203 = scmp.lt.s32.totalorder %s16, 3
      %p204 = pnand %p202, %p203
      %p205 = pneg %p204
      // Predicated region
      $region9: #{tpu_custom_call.1} parent=5 // pred_check
        _
      $region10: #{tpu_custom_call.1} parent=5 // pred_check_branch
        %207 = sbr.rel (%p204) target = $region12
      $region11: #{tpu_custom_call.1} parent=5 // pred_region
        %s208 = ssub.s32 %s16, 1
        // Predicated region
        $region13: #{tpu_custom_call.1} parent=11 // pred_check
          %p209 = pneg %p63
        $region14: #{tpu_custom_call.1} parent=11 // pred_check_branch
          %211 = sbr.rel (%p209) target = $region16
        $region15: #{tpu_custom_call.1} parent=11 // pred_region
          _
        $region16: #{tpu_custom_call.1} parent=11 // pred_fallthru
          _
        // Predicated region
        $region17: #{tpu_custom_call.1} parent=11 // pred_check
          %p212 = pneg %p84
        $region18: #{tpu_custom_call.1} parent=11 // pred_check_branch
          %214 = sbr.rel (%p212) target = $region20
        $region19: #{tpu_custom_call.1} parent=11 // pred_region
          _
        $region20: #{tpu_custom_call.1} parent=11 // pred_fallthru
          _
        // Predicated region
        $region21: #{tpu_custom_call.1} parent=11 // pred_check
          %p215 = pneg %p105
        $region22: #{tpu_custom_call.1} parent=11 // pred_check_branch
          %217 = sbr.rel (%p215) target = $region24
        $region23: #{tpu_custom_call.1} parent=11 // pred_region
          _
        $region24: #{tpu_custom_call.1} parent=11 // pred_fallthru
          _
        // Predicated region
        $region25: #{tpu_custom_call.1} parent=11 // pred_check
          %p218 = pneg %p126
        $region26: #{tpu_custom_call.1} parent=11 // pred_check_branch
          %220 = sbr.rel (%p218) target = $region28
        $region27: #{tpu_custom_call.1} parent=11 // pred_region
          _
        $region28: #{tpu_custom_call.1} parent=11 // pred_fallthru
          _
        // Predicated region
        $region29: #{tpu_custom_call.1} parent=11 // pred_check
          %p221 = pneg %p147
        $region30: #{tpu_custom_call.1} parent=11 // pred_check_branch
          %223 = sbr.rel (%p221) target = $region32
        $region31: #{tpu_custom_call.1} parent=11 // pred_region
          _
        $region32: #{tpu_custom_call.1} parent=11 // pred_fallthru
          _
        // Predicated region
        $region33: #{tpu_custom_call.1} parent=11 // pred_check
          %p224 = pneg %p168
        $region34: #{tpu_custom_call.1} parent=11 // pred_check_branch
          %226 = sbr.rel (%p224) target = $region36
        $region35: #{tpu_custom_call.1} parent=11 // pred_region
          _
        $region36: #{tpu_custom_call.1} parent=11 // pred_fallthru
          _
      $region12: #{tpu_custom_call.1} parent=5 // pred_fallthru
        _
      %p227 = scmp.lt.s32.totalorder %s16, 2
      // Predicated region
      $region37: #{tpu_custom_call.1} parent=5 // pred_check
        %p228 = pneg %p227
      $region38: #{tpu_custom_call.1} parent=5 // pred_check_branch
        %230 = sbr.rel (%p228) target = $region40
      $region39: #{tpu_custom_call.1} parent=5 // pred_region
        // Predicated region
        $region41: #{tpu_custom_call.1} parent=39 // pred_check
          %p231 = pneg %p36
        $region42: #{tpu_custom_call.1} parent=39 // pred_check_branch
          %233 = sbr.rel (%p231) target = $region44
        $region43: #{tpu_custom_call.1} parent=39 // pred_region
          %p234 = scmp.lt.s32.totalorder %s16, 1
          %s235 = scalar_select %p234, %s16, 1
          %s236 = smul.addr %s235, 2
          %s237 = smul.addr %s236, 8
          %s238 = scalar_lea.vmem %s0, %s237
        $region44: #{tpu_custom_call.1} parent=39 // pred_fallthru
          _
      $region40: #{tpu_custom_call.1} parent=5 // pred_fallthru
        _
      %p239 = scmp.le.s32.totalorder 1, %s16
      %p240 = scmp.lt.s32.totalorder %s16, 3
      %p241 = pnand %p239, %p240
      %p242 = pneg %p241
      // Predicated region
      $region45: #{tpu_custom_call.1} parent=5 // pred_check
        _
      $region46: #{tpu_custom_call.1} parent=5 // pred_check_branch
        %244 = sbr.rel (%p241) target = $region48
      $region47: #{tpu_custom_call.1} parent=5 // pred_region
        %s245 = ssub.s32 %s16, 1
        %p246 = scmp.lt.s32.totalorder %s21, 1
        %s247 = scalar_select %p246, %s21, 1
        %s248 = smul.addr %s247, 2
        %s249 = smul.addr %s248, 8
        %s250 = scalar_lea.vmem %s0, %s249
        %p251 = pneg %p42
        %p252 = pneg %p39
        %p253 = pneg %p63
        %p254 = pneg %p60
        %p255 = pneg %p84
        %p256 = pneg %p81
        %p257 = pneg %p105
        %p258 = pneg %p102
        %p259 = pneg %p126
        %p260 = pneg %p123
        %p261 = pneg %p147
        %p262 = pneg %p144
        %p263 = pneg %p168
        %p264 = pneg %p165
        %p265 = pneg %p194
        %p266 = pneg %p191
        %s267 = sand.u32 %s181, 1
        %s268 = scalar_lea.sflag [#allocation3], %s267
        %s269 = sand.u32 %s181, 1
        %s270 = smul.addr %s269, 8
        %s271 = scalar_lea.vmem [#allocation2], %s270
        %p272 = scmp.lt.s32.totalorder %s21, 1
        %s273 = scalar_select %p272, %s21, 1
        %s274 = smul.addr %s273, 2
        %s275 = smul.addr %s274, 8
        %s276 = scalar_lea.vmem %s0, %s275
        %v278 = vld [vmem:[%s276] sm:$0xff]
        %v279 = vld [vmem:[%s276 + $0x8] sm:$0xff]
        %v280 = vpack.c.bf16 %v278, %v278
        %v281 = vpack.c.bf16 %v279, %v279
        %v282 = vld [vmem:[%s1] sm:$0xf]
        %v283 = vld [vmem:[%s1 + $0x4] sm:$0xf]
        %v284 = vld [vmem:[%s1 + $0x8] sm:$0xf]
        %v285 = vld [vmem:[%s1 + $0xc] sm:$0xf]
        %v286 = vld [vmem:[%s1 + $0x10] sm:$0xf]
        %v287 = vld [vmem:[%s1 + $0x14] sm:$0xf]
        %v288 = vld [vmem:[%s1 + $0x18] sm:$0xf]
        %v289 = vld [vmem:[%s1 + $0x1c] sm:$0xf]
        %v290 = vld [vmem:[%s1 + $0x20] sm:$0xf]
        %v291 = vld [vmem:[%s1 + $0x24] sm:$0xf]
        %v292 = vld [vmem:[%s1 + $0x28] sm:$0xf]
        %v293 = vld [vmem:[%s1 + $0x2c] sm:$0xf]
        %v294 = vld [vmem:[%s1 + $0x30] sm:$0xf]
        %v295 = vld [vmem:[%s1 + $0x34] sm:$0xf]
        %v296 = vld [vmem:[%s1 + $0x38] sm:$0xf]
        %v297 = vld [vmem:[%s1 + $0x3c] sm:$0xf]
        %v298 = vld [vmem:[%s1 + $0x40] sm:$0xf]
        %v299 = vld [vmem:[%s1 + $0x44] sm:$0xf]
        %v300 = vld [vmem:[%s1 + $0x48] sm:$0xf]
        %v301 = vld [vmem:[%s1 + $0x4c] sm:$0xf]
        %v302 = vld [vmem:[%s1 + $0x50] sm:$0xf]
        %v303 = vld [vmem:[%s1 + $0x54] sm:$0xf]
        %v304 = vld [vmem:[%s1 + $0x58] sm:$0xf]
        %v305 = vld [vmem:[%s1 + $0x5c] sm:$0xf]
        %v306 = vld [vmem:[%s1 + $0x60] sm:$0xf]
        %v307 = vld [vmem:[%s1 + $0x64] sm:$0xf]
        %v308 = vld [vmem:[%s1 + $0x68] sm:$0xf]
        %v309 = vld [vmem:[%s1 + $0x6c] sm:$0xf]
        %v310 = vld [vmem:[%s1 + $0x70] sm:$0xf]
        %v311 = vld [vmem:[%s1 + $0x74] sm:$0xf]
        %v312 = vld [vmem:[%s1 + $0x78] sm:$0xf]
        %v313 = vld [vmem:[%s1 + $0x7c] sm:$0xf]
        %v314 = vld [vmem:[%s2] sm:$0x1]
        %v316 = vlaneseq
        %v317 = vshrl.u32 %v316, 7
        %v318 = vsub.s32 0, %v317
        %v319 = vrot.slane %v314, %v318
        %v353 = vunpack.c.l.b16 %v282
        %v354 = vunpack.c.l.b16 %v283
        %v355 = vunpack.c.l.b16 %v284
        %v356 = vunpack.c.l.b16 %v285
        %v357 = vunpack.c.l.b16 %v286
        %v358 = vunpack.c.l.b16 %v287
        %v359 = vunpack.c.l.b16 %v288
        %v360 = vunpack.c.l.b16 %v289
        %v361 = vunpack.c.l.b16 %v290
        %v362 = vunpack.c.l.b16 %v291
        %v363 = vunpack.c.l.b16 %v292
        %v364 = vunpack.c.l.b16 %v293
        %v365 = vunpack.c.l.b16 %v294
        %v366 = vunpack.c.l.b16 %v295
        %v367 = vunpack.c.l.b16 %v296
        %v368 = vunpack.c.l.b16 %v297
        %v369 = vunpack.c.l.b16 %v298
        %v370 = vunpack.c.l.b16 %v299
        %v371 = vunpack.c.l.b16 %v300
        %v372 = vunpack.c.l.b16 %v301
        %v373 = vunpack.c.l.b16 %v302
        %v374 = vunpack.c.l.b16 %v303
        %v375 = vunpack.c.l.b16 %v304
        %v376 = vunpack.c.l.b16 %v305
        %v377 = vunpack.c.l.b16 %v306
        %v378 = vunpack.c.l.b16 %v307
        %v379 = vunpack.c.l.b16 %v308
        %v380 = vunpack.c.l.b16 %v309
        %v381 = vunpack.c.l.b16 %v310
        %v382 = vunpack.c.l.b16 %v311
        %v383 = vunpack.c.l.b16 %v312
        %v384 = vunpack.c.l.b16 %v313
        %v385 = vpack.c.b16 %v354, %v353
        %v386 = vpack.c.b16 %v356, %v355
        %v387 = vpack.c.b16 %v358, %v357
        %v388 = vpack.c.b16 %v360, %v359
        %v389 = vpack.c.b16 %v362, %v361
        %v390 = vpack.c.b16 %v364, %v363
        %v391 = vpack.c.b16 %v366, %v365
        %v392 = vpack.c.b16 %v368, %v367
        %v393 = vpack.c.b16 %v370, %v369
        %v394 = vpack.c.b16 %v372, %v371
        %v395 = vpack.c.b16 %v374, %v373
        %v396 = vpack.c.b16 %v376, %v375
        %v397 = vpack.c.b16 %v378, %v377
        %v398 = vpack.c.b16 %v380, %v379
        %v399 = vpack.c.b16 %v382, %v381
        %v400 = vpack.c.b16 %v384, %v383
        %417 = vmatprep.subr.bf16.mxu0 0
        %418 = vmatpush1.bf16.msra.mxu0 %v385
        %419 = vmatprep.subr.bf16.mxu0 0
        %420 = vmatpush1.bf16.msra.mxu0 %v386
        %421 = vmatprep.subr.bf16.mxu0 0
        %422 = vmatpush1.bf16.msra.mxu0 %v387
        %423 = vmatprep.subr.bf16.mxu0 0
        %424 = vmatpush1.bf16.msra.mxu0 %v388
        %425 = vmatprep.subr.bf16.mxu0 0
        %426 = vmatpush1.bf16.msra.mxu0 %v389
        %427 = vmatprep.subr.bf16.mxu0 0
        %428 = vmatpush1.bf16.msra.mxu0 %v390
        %429 = vmatprep.subr.bf16.mxu0 0
        %430 = vmatpush1.bf16.msra.mxu0 %v391
        %431 = vmatprep.subr.bf16.mxu0 0
        %432 = vmatpush1.bf16.msra.mxu0 %v392
        %433 = vmatprep.subr.bf16.mxu0 0
        %434 = vmatpush1.bf16.msra.mxu0 %v393
        %435 = vmatprep.subr.bf16.mxu0 0
        %436 = vmatpush1.bf16.msra.mxu0 %v394
        %437 = vmatprep.subr.bf16.mxu0 0
        %438 = vmatpush1.bf16.msra.mxu0 %v395
        %439 = vmatprep.subr.bf16.mxu0 0
        %440 = vmatpush1.bf16.msra.mxu0 %v396
        %441 = vmatprep.subr.bf16.mxu0 0
        %442 = vmatpush1.bf16.msra.mxu0 %v397
        %443 = vmatprep.subr.bf16.mxu0 0
        %444 = vmatpush1.bf16.msra.mxu0 %v398
        %445 = vmatprep.subr.bf16.mxu0 0
        %446 = vmatpush1.bf16.msra.mxu0 %v399
        %447 = vmatprep.subr.bf16.mxu0 0
        %448 = vmatpush1.bf16.msra.mxu0 %v400
        %449 = vmatprep.mubr.bf16.mxu0 %v281
        %450 = vmatmul.mubr.bf16.gmra.mrb[0].mxu0 %v280
        %v451 = vpop.f32.mrb[0].mxu0
        %v452 = vadd.f32 %v319, %v451
        %v453 = vpop.f32.mrb[0].mxu0
        %v454 = vpop.f32.mrb[0].mxu0
        %v455 = vpop.f32.mrb[0].mxu0
        %456 = vdwg.mxu0
        %v457 = vld [vmem:[%s3] sm:$0xf]
        %v458 = vld [vmem:[%s3 + $0x4] sm:$0xf]
        %v459 = vld [vmem:[%s3 + $0x8] sm:$0xf]
        %v460 = vld [vmem:[%s3 + $0xc] sm:$0xf]
        %v461 = vld [vmem:[%s3 + $0x10] sm:$0xf]
        %v462 = vld [vmem:[%s3 + $0x14] sm:$0xf]
        %v463 = vld [vmem:[%s3 + $0x18] sm:$0xf]
        %v464 = vld [vmem:[%s3 + $0x1c] sm:$0xf]
        %v465 = vld [vmem:[%s3 + $0x20] sm:$0xf]
        %v466 = vld [vmem:[%s3 + $0x24] sm:$0xf]
        %v467 = vld [vmem:[%s3 + $0x28] sm:$0xf]
        %v468 = vld [vmem:[%s3 + $0x2c] sm:$0xf]
        %v469 = vld [vmem:[%s3 + $0x30] sm:$0xf]
        %v470 = vld [vmem:[%s3 + $0x34] sm:$0xf]
        %v471 = vld [vmem:[%s3 + $0x38] sm:$0xf]
        %v472 = vld [vmem:[%s3 + $0x3c] sm:$0xf]
        %v473 = vld [vmem:[%s3 + $0x40] sm:$0xf]
        %v474 = vld [vmem:[%s3 + $0x44] sm:$0xf]
        %v475 = vld [vmem:[%s3 + $0x48] sm:$0xf]
        %v476 = vld [vmem:[%s3 + $0x4c] sm:$0xf]
        %v477 = vld [vmem:[%s3 + $0x50] sm:$0xf]
        %v478 = vld [vmem:[%s3 + $0x54] sm:$0xf]
        %v479 = vld [vmem:[%s3 + $0x58] sm:$0xf]
        %v480 = vld [vmem:[%s3 + $0x5c] sm:$0xf]
        %v481 = vld [vmem:[%s3 + $0x60] sm:$0xf]
        %v482 = vld [vmem:[%s3 + $0x64] sm:$0xf]
        %v483 = vld [vmem:[%s3 + $0x68] sm:$0xf]
        %v484 = vld [vmem:[%s3 + $0x6c] sm:$0xf]
        %v485 = vld [vmem:[%s3 + $0x70] sm:$0xf]
        %v486 = vld [vmem:[%s3 + $0x74] sm:$0xf]
        %v487 = vld [vmem:[%s3 + $0x78] sm:$0xf]
        %v488 = vld [vmem:[%s3 + $0x7c] sm:$0xf]
        %v489 = vld [vmem:[%s4] sm:$0x1]
        %v491 = vlaneseq
        %v492 = vshrl.u32 %v491, 7
        %v493 = vsub.s32 0, %v492
        %v494 = vrot.slane %v489, %v493
        %v528 = vunpack.c.l.b16 %v457
        %v529 = vunpack.c.l.b16 %v458
        %v530 = vunpack.c.l.b16 %v459
        %v531 = vunpack.c.l.b16 %v460
        %v532 = vunpack.c.l.b16 %v461
        %v533 = vunpack.c.l.b16 %v462
        %v534 = vunpack.c.l.b16 %v463
        %v535 = vunpack.c.l.b16 %v464
        %v536 = vunpack.c.l.b16 %v465
        %v537 = vunpack.c.l.b16 %v466
        %v538 = vunpack.c.l.b16 %v467
        %v539 = vunpack.c.l.b16 %v468
        %v540 = vunpack.c.l.b16 %v469
        %v541 = vunpack.c.l.b16 %v470
        %v542 = vunpack.c.l.b16 %v471
        %v543 = vunpack.c.l.b16 %v472
        %v544 = vunpack.c.l.b16 %v473
        %v545 = vunpack.c.l.b16 %v474
        %v546 = vunpack.c.l.b16 %v475
        %v547 = vunpack.c.l.b16 %v476
        %v548 = vunpack.c.l.b16 %v477
        %v549 = vunpack.c.l.b16 %v478
        %v550 = vunpack.c.l.b16 %v479
        %v551 = vunpack.c.l.b16 %v480
        %v552 = vunpack.c.l.b16 %v481
        %v553 = vunpack.c.l.b16 %v482
        %v554 = vunpack.c.l.b16 %v483
        %v555 = vunpack.c.l.b16 %v484
        %v556 = vunpack.c.l.b16 %v485
        %v557 = vunpack.c.l.b16 %v486
        %v558 = vunpack.c.l.b16 %v487
        %v559 = vunpack.c.l.b16 %v488
        %v560 = vpack.c.b16 %v529, %v528
        %v561 = vpack.c.b16 %v531, %v530
        %v562 = vpack.c.b16 %v533, %v532
        %v563 = vpack.c.b16 %v535, %v534
        %v564 = vpack.c.b16 %v537, %v536
        %v565 = vpack.c.b16 %v539, %v538
        %v566 = vpack.c.b16 %v541, %v540
        %v567 = vpack.c.b16 %v543, %v542
        %v568 = vpack.c.b16 %v545, %v544
        %v569 = vpack.c.b16 %v547, %v546
        %v570 = vpack.c.b16 %v549, %v548
        %v571 = vpack.c.b16 %v551, %v550
        %v572 = vpack.c.b16 %v553, %v552
        %v573 = vpack.c.b16 %v555, %v554
        %v574 = vpack.c.b16 %v557, %v556
        %v575 = vpack.c.b16 %v559, %v558
        %592 = vmatprep.subr.bf16.mxu0 0
        %593 = vmatpush1.bf16.msra.mxu0 %v560
        %594 = vmatprep.subr.bf16.mxu0 0
        %595 = vmatpush1.bf16.msra.mxu0 %v561
        %596 = vmatprep.subr.bf16.mxu0 0
        %597 = vmatpush1.bf16.msra.mxu0 %v562
        %598 = vmatprep.subr.bf16.mxu0 0
        %599 = vmatpush1.bf16.msra.mxu0 %v563
        %600 = vmatprep.subr.bf16.mxu0 0
        %601 = vmatpush1.bf16.msra.mxu0 %v564
        %602 = vmatprep.subr.bf16.mxu0 0
        %603 = vmatpush1.bf16.msra.mxu0 %v565
        %604 = vmatprep.subr.bf16.mxu0 0
        %605 = vmatpush1.bf16.msra.mxu0 %v566
        %606 = vmatprep.subr.bf16.mxu0 0
        %607 = vmatpush1.bf16.msra.mxu0 %v567
        %608 = vmatprep.subr.bf16.mxu0 0
        %609 = vmatpush1.bf16.msra.mxu0 %v568
        %610 = vmatprep.subr.bf16.mxu0 0
        %611 = vmatpush1.bf16.msra.mxu0 %v569
        %612 = vmatprep.subr.bf16.mxu0 0
        %613 = vmatpush1.bf16.msra.mxu0 %v570
        %614 = vmatprep.subr.bf16.mxu0 0
        %615 = vmatpush1.bf16.msra.mxu0 %v571
        %616 = vmatprep.subr.bf16.mxu0 0
        %617 = vmatpush1.bf16.msra.mxu0 %v572
        %618 = vmatprep.subr.bf16.mxu0 0
        %619 = vmatpush1.bf16.msra.mxu0 %v573
        %620 = vmatprep.subr.bf16.mxu0 0
        %621 = vmatpush1.bf16.msra.mxu0 %v574
        %622 = vmatprep.subr.bf16.mxu0 0
        %623 = vmatpush1.bf16.msra.mxu0 %v575
        %624 = vmatprep.mubr.bf16.mxu0 %v281
        %625 = vmatmul.mubr.bf16.gmra.mrb[0].mxu0 %v280
        %v626 = vpop.f32.mrb[0].mxu0
        %v627 = vadd.f32 %v494, %v626
        %v628 = vpop.f32.mrb[0].mxu0
        %v629 = vpop.f32.mrb[0].mxu0
        %v630 = vpop.f32.mrb[0].mxu0
        %631 = vdwg.mxu0
        %v632 = vld [vmem:[%s5] sm:$0xf]
        %v633 = vld [vmem:[%s5 + $0x4] sm:$0xf]
        %v634 = vld [vmem:[%s5 + $0x8] sm:$0xf]
        %v635 = vld [vmem:[%s5 + $0xc] sm:$0xf]
        %v636 = vld [vmem:[%s5 + $0x10] sm:$0xf]
        %v637 = vld [vmem:[%s5 + $0x14] sm:$0xf]
        %v638 = vld [vmem:[%s5 + $0x18] sm:$0xf]
        %v639 = vld [vmem:[%s5 + $0x1c] sm:$0xf]
        %v640 = vld [vmem:[%s5 + $0x20] sm:$0xf]
        %v641 = vld [vmem:[%s5 + $0x24] sm:$0xf]
        %v642 = vld [vmem:[%s5 + $0x28] sm:$0xf]
        %v643 = vld [vmem:[%s5 + $0x2c] sm:$0xf]
        %v644 = vld [vmem:[%s5 + $0x30] sm:$0xf]
        %v645 = vld [vmem:[%s5 + $0x34] sm:$0xf]
        %v646 = vld [vmem:[%s5 + $0x38] sm:$0xf]
        %v647 = vld [vmem:[%s5 + $0x3c] sm:$0xf]
        %v648 = vld [vmem:[%s5 + $0x40] sm:$0xf]
        %v649 = vld [vmem:[%s5 + $0x44] sm:$0xf]
        %v650 = vld [vmem:[%s5 + $0x48] sm:$0xf]
        %v651 = vld [vmem:[%s5 + $0x4c] sm:$0xf]
        %v652 = vld [vmem:[%s5 + $0x50] sm:$0xf]
        %v653 = vld [vmem:[%s5 + $0x54] sm:$0xf]
        %v654 = vld [vmem:[%s5 + $0x58] sm:$0xf]
        %v655 = vld [vmem:[%s5 + $0x5c] sm:$0xf]
        %v656 = vld [vmem:[%s5 + $0x60] sm:$0xf]
        %v657 = vld [vmem:[%s5 + $0x64] sm:$0xf]
        %v658 = vld [vmem:[%s5 + $0x68] sm:$0xf]
        %v659 = vld [vmem:[%s5 + $0x6c] sm:$0xf]
        %v660 = vld [vmem:[%s5 + $0x70] sm:$0xf]
        %v661 = vld [vmem:[%s5 + $0x74] sm:$0xf]
        %v662 = vld [vmem:[%s5 + $0x78] sm:$0xf]
        %v663 = vld [vmem:[%s5 + $0x7c] sm:$0xf]
        %v664 = vld [vmem:[%s6] sm:$0x1]
        %v666 = vlaneseq
        %v667 = vshrl.u32 %v666, 7
        %v668 = vsub.s32 0, %v667
        %v669 = vrot.slane %v664, %v668
        %v703 = vunpack.c.l.b16 %v632
        %v704 = vunpack.c.l.b16 %v633
        %v705 = vunpack.c.l.b16 %v634
        %v706 = vunpack.c.l.b16 %v635
        %v707 = vunpack.c.l.b16 %v636
        %v708 = vunpack.c.l.b16 %v637
        %v709 = vunpack.c.l.b16 %v638
        %v710 = vunpack.c.l.b16 %v639
        %v711 = vunpack.c.l.b16 %v640
        %v712 = vunpack.c.l.b16 %v641
        %v713 = vunpack.c.l.b16 %v642
        %v714 = vunpack.c.l.b16 %v643
        %v715 = vunpack.c.l.b16 %v644
        %v716 = vunpack.c.l.b16 %v645
        %v717 = vunpack.c.l.b16 %v646
        %v718 = vunpack.c.l.b16 %v647
        %v719 = vunpack.c.l.b16 %v648
        %v720 = vunpack.c.l.b16 %v649
        %v721 = vunpack.c.l.b16 %v650
        %v722 = vunpack.c.l.b16 %v651
        %v723 = vunpack.c.l.b16 %v652
        %v724 = vunpack.c.l.b16 %v653
        %v725 = vunpack.c.l.b16 %v654
        %v726 = vunpack.c.l.b16 %v655
        %v727 = vunpack.c.l.b16 %v656
        %v728 = vunpack.c.l.b16 %v657
        %v729 = vunpack.c.l.b16 %v658
        %v730 = vunpack.c.l.b16 %v659
        %v731 = vunpack.c.l.b16 %v660
        %v732 = vunpack.c.l.b16 %v661
        %v733 = vunpack.c.l.b16 %v662
        %v734 = vunpack.c.l.b16 %v663
        %v735 = vpack.c.b16 %v704, %v703
        %v736 = vpack.c.b16 %v706, %v705
        %v737 = vpack.c.b16 %v708, %v707
        %v738 = vpack.c.b16 %v710, %v709
        %v739 = vpack.c.b16 %v712, %v711
        %v740 = vpack.c.b16 %v714, %v713
        %v741 = vpack.c.b16 %v716, %v715
        %v742 = vpack.c.b16 %v718, %v717
        %v743 = vpack.c.b16 %v720, %v719
        %v744 = vpack.c.b16 %v722, %v721
        %v745 = vpack.c.b16 %v724, %v723
        %v746 = vpack.c.b16 %v726, %v725
        %v747 = vpack.c.b16 %v728, %v727
        %v748 = vpack.c.b16 %v730, %v729
        %v749 = vpack.c.b16 %v732, %v731
        %v750 = vpack.c.b16 %v734, %v733
        %767 = vmatprep.subr.bf16.mxu0 0
        %768 = vmatpush1.bf16.msra.mxu0 %v735
        %769 = vmatprep.subr.bf16.mxu0 0
        %770 = vmatpush1.bf16.msra.mxu0 %v736
        %771 = vmatprep.subr.bf16.mxu0 0
        %772 = vmatpush1.bf16.msra.mxu0 %v737
        %773 = vmatprep.subr.bf16.mxu0 0
        %774 = vmatpush1.bf16.msra.mxu0 %v738
        %775 = vmatprep.subr.bf16.mxu0 0
        %776 = vmatpush1.bf16.msra.mxu0 %v739
        %777 = vmatprep.subr.bf16.mxu0 0
        %778 = vmatpush1.bf16.msra.mxu0 %v740
        %779 = vmatprep.subr.bf16.mxu0 0
        %780 = vmatpush1.bf16.msra.mxu0 %v741
        %781 = vmatprep.subr.bf16.mxu0 0
        %782 = vmatpush1.bf16.msra.mxu0 %v742
        %783 = vmatprep.subr.bf16.mxu0 0
        %784 = vmatpush1.bf16.msra.mxu0 %v743
        %785 = vmatprep.subr.bf16.mxu0 0
        %786 = vmatpush1.bf16.msra.mxu0 %v744
        %787 = vmatprep.subr.bf16.mxu0 0
        %788 = vmatpush1.bf16.msra.mxu0 %v745
        %789 = vmatprep.subr.bf16.mxu0 0
        %790 = vmatpush1.bf16.msra.mxu0 %v746
        %791 = vmatprep.subr.bf16.mxu0 0
        %792 = vmatpush1.bf16.msra.mxu0 %v747
        %793 = vmatprep.subr.bf16.mxu0 0
        %794 = vmatpush1.bf16.msra.mxu0 %v748
        %795 = vmatprep.subr.bf16.mxu0 0
        %796 = vmatpush1.bf16.msra.mxu0 %v749
        %797 = vmatprep.subr.bf16.mxu0 0
        %798 = vmatpush1.bf16.msra.mxu0 %v750
        %799 = vmatprep.mubr.bf16.mxu0 %v281
        %800 = vmatmul.mubr.bf16.gmra.mrb[0].mxu0 %v280
        %v801 = vpop.f32.mrb[0].mxu0
        %v802 = vadd.f32 %v669, %v801
        %v803 = vpop.f32.mrb[0].mxu0
        %v804 = vpop.f32.mrb[0].mxu0
        %v805 = vpop.f32.mrb[0].mxu0
        %806 = vdwg.mxu0
        %vm807 = vcmask 261120
        %v809 = vsel %vm807, %v452, 0
        %v812 = vsel %vm807, %v627, 0
        %814 = vmatprep.subr.mxu0 0.0
        %815 = vmatpush1.xpose.msra.mxu0 %v812
        %816 = vmatprep.subr.mxu0 0.0
        %817 = vmatpush1.xpose.msra.mxu0 0.0
        %818 = vmatprep.subr.mxu0 0.0
        %819 = vmatpush1.xpose.msra.mxu0 0.0
        %820 = vmatprep.subr.mxu0 0.0
        %821 = vmatpush1.xpose.msra.mxu0 0.0
        %822 = vmatprep.subr.mxu0 0.0
        %823 = vmatpush1.xpose.msra.mxu0 0.0
        %824 = vmatprep.subr.mxu0 0.0
        %825 = vmatpush1.xpose.msra.mxu0 0.0
        %826 = vmatprep.subr.mxu0 0.0
        %827 = vmatpush1.xpose.msra.mxu0 0.0
        %828 = vmatprep.subr.mxu0 0.0
        %829 = vmatpush1.xpose.msra.mxu0 0.0
        %830 = vmatprep.subr.mxu0 0.0
        %831 = vmatpush1.xpose.msra.mxu0 0.0
        %832 = vmatprep.subr.mxu0 0.0
        %833 = vmatpush1.xpose.msra.mxu0 0.0
        %834 = vmatprep.subr.mxu0 0.0
        %835 = vmatpush1.xpose.msra.mxu0 0.0
        %836 = vmatprep.subr.mxu0 0.0
        %837 = vmatpush1.xpose.msra.mxu0 0.0
        %838 = vmatprep.subr.mxu0 0.0
        %839 = vmatpush1.xpose.msra.mxu0 0.0
        %840 = vmatprep.subr.mxu0 0.0
        %841 = vmatpush1.xpose.msra.mxu0 0.0
        %842 = vmatprep.subr.mxu0 0.0
        %843 = vmatpush1.xpose.msra.mxu0 0.0
        %844 = vmatprep.subr.mxu0 0.0
        %845 = vmatpush1.xpose.msra.mxu0 0.0
        %846 = vmatprep.subr.mxu0 0.0
        %847 = vmatpush1.xpose.msra.mxu0 0.0
        %848 = vmatprep.subr.mxu0 0.0
        %849 = vmatpush1.xpose.msra.mxu0 0.0
        %850 = vmatprep.subr.mxu0 0.0
        %851 = vmatpush1.xpose.msra.mxu0 0.0
        %852 = vmatprep.subr.mxu0 0.0
        %853 = vmatpush1.xpose.msra.mxu0 0.0
        %854 = vmatprep.subr.mxu0 0.0
        %855 = vmatpush1.xpose.msra.mxu0 0.0
        %856 = vmatprep.subr.mxu0 0.0
        %857 = vmatpush1.xpose.msra.mxu0 0.0
        %858 = vmatprep.subr.mxu0 0.0
        %859 = vmatpush1.xpose.msra.mxu0 0.0
        %860 = vmatprep.subr.mxu0 0.0
        %861 = vmatpush1.xpose.msra.mxu0 0.0
        %862 = vmatprep.subr.mxu0 0.0
        %863 = vmatpush1.xpose.msra.mxu0 0.0
        %864 = vmatprep.subr.mxu0 0.0
        %865 = vmatpush1.xpose.msra.mxu0 0.0
        %866 = vmatprep.subr.mxu0 0.0
        %867 = vmatpush1.xpose.msra.mxu0 0.0
        %868 = vmatprep.subr.mxu0 0.0
        %869 = vmatpush1.xpose.msra.mxu0 0.0
        %870 = vmatprep.subr.mxu0 0.0
        %871 = vmatpush1.xpose.msra.mxu0 0.0
        %872 = vmatprep.subr.mxu0 0.0
        %873 = vmatpush1.xpose.msra.mxu0 0.0
        %874 = vmatprep.subr.mxu0 0.0
        %875 = vmatpush1.xpose.msra.mxu0 0.0
        %876 = vmatprep.subr.mxu0 0.0
        %877 = vmatpush1.xpose.msra.mxu0 0.0
        %878 = vmatprep.mubr.f32.mxu0 0.0
        %879 = vmatmul.mubr.f32.gmra.mrb[0].mxu0 %v809
        %v880 = vpop.f32.mrb[0].mxu0
        %v881 = vadd.f32 0.0, %v880
        %v882 = vpop.f32.mrb[0].mxu0
        %883 = vdwg.mxu0
        %v884 = vmul.f32 %v881, 0.17677669
        %v885 = vlaneseq
        %v886 = vshrl.u32 %v885, 7
        %v887 = vlaneseq
        %v888 = vand.u32 %v887, 127
        %vm889 = vcmp.le.s32.totalorder %v888, %v886
        %v890 = vsel %vm889, %v884, -inf
        %vm891 = vcmask 64512
        %v892 = vsel %vm891, %v890, -inf
        %893 = vmax.xlane.f32.xlu0 %v892
        %v894 = vpop.xlane.xlu0 %893
        %v895 = vsub.f32 %v890, %v894
        %v896 = vmul.f32 %v895, 1.442695
        %v897 = vpow.pop %v896
        %v898 = vsel %vm891, %v897, 0.0
        %899 = vadd.xlane.f32.xlu0 %v898
        %v900 = vpop.xlane.xlu0 %899
        %v901 = vrcp.pop %v900
        %v902 = vmul.f32 %v897, %v901
        %v904 = vsel %vm891, %v902, 0
        %906 = vmatprep.subr.mxu0 0.0
        %907 = vmatpush1.msra.mxu0 %v802
        %908 = vmatprep.subr.mxu0 0.0
        %909 = vmatpush1.msra.mxu0 0.0
        %910 = vmatprep.subr.mxu0 0.0
        %911 = vmatpush1.msra.mxu0 0.0
        %912 = vmatprep.subr.mxu0 0.0
        %913 = vmatpush1.msra.mxu0 0.0
        %914 = vmatprep.subr.mxu0 0.0
        %915 = vmatpush1.msra.mxu0 0.0
        %916 = vmatprep.subr.mxu0 0.0
        %917 = vmatpush1.msra.mxu0 0.0
        %918 = vmatprep.subr.mxu0 0.0
        %919 = vmatpush1.msra.mxu0 0.0
        %920 = vmatprep.subr.mxu0 0.0
        %921 = vmatpush1.msra.mxu0 0.0
        %922 = vmatprep.subr.mxu0 0.0
        %923 = vmatpush1.msra.mxu0 0.0
        %924 = vmatprep.subr.mxu0 0.0
        %925 = vmatpush1.msra.mxu0 0.0
        %926 = vmatprep.subr.mxu0 0.0
        %927 = vmatpush1.msra.mxu0 0.0
        %928 = vmatprep.subr.mxu0 0.0
        %929 = vmatpush1.msra.mxu0 0.0
        %930 = vmatprep.subr.mxu0 0.0
        %931 = vmatpush1.msra.mxu0 0.0
        %932 = vmatprep.subr.mxu0 0.0
        %933 = vmatpush1.msra.mxu0 0.0
        %934 = vmatprep.subr.mxu0 0.0
        %935 = vmatpush1.msra.mxu0 0.0
        %936 = vmatprep.subr.mxu0 0.0
        %937 = vmatpush1.msra.mxu0 0.0
        %938 = vmatprep.subr.mxu0 0.0
        %939 = vmatpush1.msra.mxu0 0.0
        %940 = vmatprep.subr.mxu0 0.0
        %941 = vmatpush1.msra.mxu0 0.0
        %942 = vmatprep.subr.mxu0 0.0
        %943 = vmatpush1.msra.mxu0 0.0
        %944 = vmatprep.subr.mxu0 0.0
        %945 = vmatpush1.msra.mxu0 0.0
        %946 = vmatprep.subr.mxu0 0.0
        %947 = vmatpush1.msra.mxu0 0.0
        %948 = vmatprep.subr.mxu0 0.0
        %949 = vmatpush1.msra.mxu0 0.0
        %950 = vmatprep.subr.mxu0 0.0
        %951 = vmatpush1.msra.mxu0 0.0
        %952 = vmatprep.subr.mxu0 0.0
        %953 = vmatpush1.msra.mxu0 0.0
        %954 = vmatprep.subr.mxu0 0.0
        %955 = vmatpush1.msra.mxu0 0.0
        %956 = vmatprep.subr.mxu0 0.0
        %957 = vmatpush1.msra.mxu0 0.0
        %958 = vmatprep.subr.mxu0 0.0
        %959 = vmatpush1.msra.mxu0 0.0
        %960 = vmatprep.subr.mxu0 0.0
        %961 = vmatpush1.msra.mxu0 0.0
        %962 = vmatprep.subr.mxu0 0.0
        %963 = vmatpush1.msra.mxu0 0.0
        %964 = vmatprep.subr.mxu0 0.0
        %965 = vmatpush1.msra.mxu0 0.0
        %966 = vmatprep.subr.mxu0 0.0
        %967 = vmatpush1.msra.mxu0 0.0
        %968 = vmatprep.subr.mxu0 0.0
        %969 = vmatpush1.msra.mxu0 0.0
        %970 = vmatprep.mubr.f32.mxu0 0.0
        %971 = vmatmul.mubr.f32.gmra.mrb[0].mxu0 %v904
        %v972 = vpop.f32.mrb[0].mxu0
        %v973 = vadd.f32 0.0, %v972
        %v974 = vpop.f32.mrb[0].mxu0
        %975 = vdwg.mxu0
        %976 = vst.msk [vmem:[%s271] sm:$0xff] %vm807, %v973
        %s977 = sand.u32 %s181, 1
        %s978 = scalar_lea.sflag [#allocation3], %s977
        %s979 = sand.u32 %s181, 1
        %s980 = smul.addr %s979, 8
        %s981 = scalar_lea.vmem [#allocation2], %s980
        // Predicated region
        $region49: #{tpu_custom_call.1} parent=47 // pred_check
          %p982 = pneg %p191
        $region50: #{tpu_custom_call.1} parent=47 // pred_check_branch
          %984 = sbr.rel (%p982) target = $region52
        $region51: #{tpu_custom_call.1} parent=47 // pred_region
          %s986 = ssub.s32 128, 128
          %987 = vsyncadd %s978, %s986
          %s988 = smul.addr %s21, 128
          %s989 = scalar_lea.hbm %s7, %s988
          %s991 = sshll.u32 %s981, 4
          %s992 = int_to_ptr.vmem [resolvable:$true] %s991
          %994 = dma.vmem_to_hbm [thread:$0]  %s992, 128, %s989, %s978
        $region52: #{tpu_custom_call.1} parent=47 // pred_fallthru
          _
      $region48: #{tpu_custom_call.1} parent=5 // pred_fallthru
        _
      %p995 = scmp.le.s32.totalorder 2, %s16
      // Predicated region
      $region53: #{tpu_custom_call.1} parent=5 // pred_check
        %p996 = pneg %p995
      $region54: #{tpu_custom_call.1} parent=5 // pred_check_branch
        %998 = sbr.rel (%p996) target = $region56
      $region55: #{tpu_custom_call.1} parent=5 // pred_region
        %s999 = ssub.s32 %s16, 2
        // Predicated region
        $region57: #{tpu_custom_call.1} parent=55 // pred_check
          %p1000 = pneg %p197
        $region58: #{tpu_custom_call.1} parent=55 // pred_check_branch
          %1002 = sbr.rel (%p1000) target = $region60
        $region59: #{tpu_custom_call.1} parent=55 // pred_region
          %s1003 = sand.u32 %s182, 1
          %s1004 = scalar_lea.sflag [#allocation3], %s1003
          %s1005 = sand.u32 %s182, 1
          %s1006 = smul.addr %s1005, 8
          %s1007 = scalar_lea.vmem [#allocation2], %s1006
          %1008 = dma.done %s1004, 128
        $region60: #{tpu_custom_call.1} parent=55 // pred_fallthru
          _
      $region56: #{tpu_custom_call.1} parent=5 // pred_fallthru
        _
    $region6: #{tpu_custom_call.1} parent=1 // loop_footer
      %s20 = sadd.s32 1, %s16
    $region7: #{tpu_custom_call.1} parent=1 // loop_footer_branch
      %15 = sbr.rel target = $region3
    $region8: #{tpu_custom_call.1} parent=1 // loop_exit
      _
    %1009 = vsyncpa [#allocation3], 1
    %s1010 = scalar_lea.sflag [#allocation3], 1
    %1011 = vsyncpa %s1010, 1

</llo_original>
